<compile_context>
chip_gen: v7x
topology: tpu7x:2x2x1
jax: 0.10.0
libtpu: 0.0.40
codegen_flags: <defaults>
</compile_context>

<pallas_src>
import math

import jax
import jax.numpy as jnp
from jax.experimental import pallas as pl
from jax.experimental.pallas import tpu as pltpu


def _copy_kernel(x_ref, o_ref):
    # Pure data movement: reshape has no arithmetic, the hot path is the copy itself.
    o_ref[...] = x_ref[...]


_LANE = 128
_SMALL_BYTES = 64 * 1024  # below this, kernel-launch overhead >> the copy itself


def _sublane_multiple(itemsize: int) -> int:
    # Sub-32-bit dtypes pack along sublanes.
    return {4: 8, 2: 16, 1: 32}.get(itemsize, 8)


def pallas_reshape(
    x: jax.Array, target_shape: tuple[int, ...], *, force_copy: bool = False
) -> jax.Array:
    """Equivalent of Reshape(*target_shape).forward(x)."""
    batch = x.shape[0]
    n_in = math.prod(x.shape[1:]) if x.ndim > 1 else 1
    n_out = math.prod(target_shape)
    if n_in != n_out:
        raise ValueError(
            f"cannot reshape per-batch size {n_in} into shape {target_shape}"
        )

    out_shape = (batch, *target_shape)
    itemsize = jnp.dtype(x.dtype).itemsize
    total = batch * n_in
    total_bytes = total * itemsize

    # Reshape of a contiguous array is a metadata-only view in XLA: skip the Pallas
    # round trip (2N bytes of HBM traffic + launch overhead) unless it is worth it.
    if not force_copy and total_bytes < _SMALL_BYTES:
        return x.reshape(out_shape)

    sub = _sublane_multiple(itemsize)
    if total % (_LANE * sub) != 0:
        # No clean lane/sublane-aligned slab; a plain reshape is correct and free.
        return x.reshape(out_shape)

    # Lane-dense slab: largest C = 128*c (c <= 16) dividing `total` with rows a
    # multiple of the sublane packing.  Whole-array flatten preserves row-major order.
    C = None
    for c_mult in range(16, 0, -1):
        cand = _LANE * c_mult
        if total % cand == 0 and (total // cand) % sub == 0:
            C = cand
            break
    if C is None:
        return x.reshape(out_shape)
    rows = total // C

    # ~2 MiB blocks: big enough for HBM roofline, small enough that double-buffered
    # input + output (4 buffers) stays far below v7x's 64 MiB (32 MiB scoped) VMEM.
    target_block_bytes = 2 * 1024 * 1024
    block_rows = max(sub, (target_block_bytes // (C * itemsize)) // sub * sub)
    block_rows = min(block_rows, rows)
    # Keep >= 2 grid iterations when possible so v7x's two TensorCores split the copy.
    if rows // block_rows < 2 and rows >= 2 * sub:
        block_rows = max(sub, (rows // 2) // sub * sub)

    grid_rows = pl.cdiv(rows, block_rows)

    x_flat = x.reshape(rows, C)

    y_flat = pl.pallas_call(
        _copy_kernel,
        out_shape=jax.ShapeDtypeStruct((rows, C), x.dtype),
        grid_spec=pltpu.PrefetchScalarGridSpec(
            num_scalar_prefetch=0,
            grid=(grid_rows,),
            in_specs=[pl.BlockSpec((block_rows, C), lambda i: (i, 0))],
            out_specs=pl.BlockSpec((block_rows, C), lambda i: (i, 0)),
        ),
        compiler_params=pltpu.CompilerParams(
            dimension_semantics=("parallel",),
        ),
        # Pure copy: let XLA reuse the input buffer for the output.
        input_output_aliases={0: 0},
        cost_estimate=pl.CostEstimate(
            flops=0, transcendentals=0, bytes_accessed=2 * total_bytes
        ),
    )(x_flat)

    # Final view into the requested shape (zero-cost glue).
    return y_flat.reshape(out_shape)


if __name__ == "__main__":
    key = jax.random.PRNGKey(0)

    # --- Test A: module-sized example, (2, 4, 16, 16) -> (2, 16, 64). Tiny, so the
    # wrapper short-circuits to a metadata-only reshape (still the module's semantics).
    xa = jax.random.normal(key, (2, 4, 16, 16), dtype=jnp.float32)
    ta = (16, 64)
    ya = pallas_reshape(xa, ta)
    jax.block_until_ready(ya)
    assert ya.shape == (2, 16, 64), ya.shape
    assert ya.dtype == xa.dtype
    assert bool(jnp.array_equal(ya, xa.reshape(xa.shape[0], *ta)))

    # --- Test B: same small shape, but force the Pallas copy path (single block).
    yb = pallas_reshape(xa, ta, force_copy=True)
    jax.block_until_ready(yb)
    assert yb.shape == (2, 16, 64)
    assert bool(jnp.array_equal(yb, xa.reshape(xa.shape[0], *ta)))

    # --- Test C: slightly larger input so the Pallas path runs with a lane-dense
    # (rows, 2048) slab and a multi-step parallel row grid: (2, 8, 64, 128) -> (2, 8, 8192).
    key_c = jax.random.PRNGKey(1)
    xc = jax.random.normal(key_c, (2, 8, 64, 128), dtype=jnp.float32)
    tc = (8, 8192)
    yc = pallas_reshape(xc, tc)
    jax.block_until_ready(yc)
    assert yc.shape == (2, 8, 8192), yc.shape
    assert yc.dtype == xc.dtype
    assert bool(jnp.array_equal(yc, xc.reshape(xc.shape[0], *tc)))

    print("KERNEL_OK")
</pallas_src>

<mosaic_0001>
module attributes {stable_mosaic.version = 11 : i64} {
  func.func @_copy_kernel(%arg0: i32, %arg1: memref<8x256xf32, #tpu.memory_space<vmem>>, %arg2: memref<8x256xf32, #tpu.memory_space<vmem>>) attributes {dimension_semantics = [#tpu.dimension_semantics<parallel>], iteration_bounds = array<i64: 1>, scalar_prefetch = 0 : i64, scratch_operands = 0 : i64, tpu.core_type = #tpu.core_type<tc>, window_params = [{transform_indices = @transform_0, window_bounds = array<i64: 8, 256>}, {transform_indices = @transform_1, window_bounds = array<i64: 8, 256>}]} {
    %c0 = arith.constant 0 : index
    %c0_0 = arith.constant 0 : index
    %0 = vector.load %arg1[%c0, %c0_0] : memref<8x256xf32, #tpu.memory_space<vmem>>, vector<8x256xf32>
    %c0_1 = arith.constant 0 : index
    %c0_2 = arith.constant 0 : index
    %1 = vector.load %arg2[%c0_1, %c0_2] : memref<8x256xf32, #tpu.memory_space<vmem>>, vector<8x256xf32>
    tpu.vector_store %arg2[%c0_1, %c0_2], %0 {strides = array<i32>} : memref<8x256xf32, #tpu.memory_space<vmem>>, vector<8x256xf32>,
    return
  }
  func.func @transform_0(%arg0: i32) -> (i32, i32) {
    %c0_i32 = arith.constant 0 : i32
    %c0_i32_0 = arith.constant 0 : i32
    return %arg0, %c0_i32 : i32, i32
  }
  func.func @transform_1(%arg0: i32) -> (i32, i32) {
    %c0_i32 = arith.constant 0 : i32
    %c0_i32_0 = arith.constant 0 : i32
    return %arg0, %c0_i32 : i32, i32
  }
}

</mosaic_0001>

<llo_original>
// kernel: tpu_custom_call.1
$region0: #{tpu_custom_call.1}
  #allocation0 [shape = 'u32[]', space=smem, size = 0x4, offset = 0x4, fixed_abs, tag = 'smem constant byte address 0x4 - core index']
  #allocation1 [shape = 'u32[144,128]{1,0:T(1,128)}', space=vmem, size = 0x12000, scoped, tag = 'internal scratch']
  %s0 = inlined_call_operand.hbm [shape: f32[8,256], index: 0, kind: input, shape index: {}, may-alias: {0,1}]
  %s1 = inlined_call_operand.hbm [shape: f32[8,256], index: 1, kind: output, shape index: {}, may-alias: {0,1}]
  %s2 = sld [smem:[#allocation0]]
  $region18: #{tpu_custom_call.1} parent=0
    _
  %s4 = ssub.s32 1, %s2
  %s5 = scalar_select 0, %s4, %s2
  $region1: #{tpu_custom_call.1} parent=0
    #allocation2 [shape = 'u8[8192]{0}', space=vmem, size = 0x2000, scoped, tag = 'input window, operand 0, single buffered']
    #allocation3 [shape = 's32[1]{0}', space=sflag, size = 0x4, scoped, tag = 'scoped memory for tpu_custom_call.1']
    #allocation4 [shape = 's32[1]{0}', space=sflag, size = 0x4, scoped, tag = 'scoped memory for tpu_custom_call.1']
    #allocation5 [shape = 'u8[8192]{0}', space=vmem, size = 0x2000, scoped, tag = 'output window, operand 0, single buffered']
    %6 = vsyncpa [#allocation3], 0
    %7 = vsyncpa [#allocation4], 0
    // Predicated region
    $region2: #{tpu_custom_call.1} parent=1 // pred_check
      _
    $region3: #{tpu_custom_call.1} parent=1 // pred_check_branch
      %9 = sbr.rel (0) target = $region5
    $region4: #{tpu_custom_call.1} parent=1 // pred_region
      %s11 = ssub.s32 256, 256
      %12 = vsyncadd [#allocation3], %s11
      %s14 = sshll.u32 [#allocation2], 4
      %s15 = int_to_ptr.vmem [resolvable:$true] %s14
      %17 = dma.hbm_to_vmem [thread:$0]  %s0, 256, %s15, [#allocation3]
    $region5: #{tpu_custom_call.1} parent=1 // pred_fallthru
      _
    // Predicated region
    $region6: #{tpu_custom_call.1} parent=1 // pred_check
      _
    $region7: #{tpu_custom_call.1} parent=1 // pred_check_branch
      %19 = sbr.rel (0) target = $region9
    $region8: #{tpu_custom_call.1} parent=1 // pred_region
      %20 = dma.done [#allocation3], 256
    $region9: #{tpu_custom_call.1} parent=1 // pred_fallthru
      _
    %v21 = vld [vmem:[#allocation2] sm:$0xff]
    %v22 = vld [vmem:[#allocation2 + $0x8] sm:$0xff]
    %23 = vst [vmem:[#allocation5] sm:$0xff] %v21
    %24 = vst [vmem:[#allocation5 + $0x8] sm:$0xff] %v22
    // Predicated region
    $region10: #{tpu_custom_call.1} parent=1 // pred_check
      _
    $region11: #{tpu_custom_call.1} parent=1 // pred_check_branch
      %26 = sbr.rel (0) target = $region13
    $region12: #{tpu_custom_call.1} parent=1 // pred_region
      %s28 = ssub.s32 256, 256
      %29 = vsyncadd [#allocation4], %s28
      %s31 = sshll.u32 [#allocation5], 4
      %s32 = int_to_ptr.vmem [resolvable:$true] %s31
      %34 = dma.vmem_to_hbm [thread:$0]  %s32, 256, %s1, [#allocation4]
    $region13: #{tpu_custom_call.1} parent=1 // pred_fallthru
      _
    // Predicated region
    $region14: #{tpu_custom_call.1} parent=1 // pred_check
      _
    $region15: #{tpu_custom_call.1} parent=1 // pred_check_branch
      %36 = sbr.rel (0) target = $region17
    $region16: #{tpu_custom_call.1} parent=1 // pred_region
      %37 = dma.done [#allocation4], 256
    $region17: #{tpu_custom_call.1} parent=1 // pred_fallthru
      _
    %38 = vsyncpa [#allocation3], 1
    %39 = vsyncpa [#allocation4], 1

</llo_original>
